<compile_context>
chip_gen: v7x
topology: tpu7x:2x2x1
jax: 0.10.0
libtpu: 0.0.40
codegen_flags: <defaults>
</compile_context>

<pallas_src>
import math

import numpy as np
import jax
import jax.numpy as jnp
from jax import lax
from jax.experimental import pallas as pl
from jax.experimental.pallas import tpu as pltpu


# ----------------------------------------------------------------------------
# PositionalEncoding kernel
# ----------------------------------------------------------------------------

def _pe_kernel(x_ref, w1_ref, b1_ref, w2_ref, b2_ref, pe_ref, o_ref):
    # x_ref : (1, tn, src)   one joint row, tn = batch*time columns
    # w1_ref: (src, hid)     linear1 weight (transposed), maybe bf16
    # b1_ref: (1, hid)       f32
    # w2_ref: (hid, E)       linear2 weight (transposed, * sqrt(E)), maybe bf16
    # b2_ref: (1, E)         f32 (already * sqrt(E))
    # pe_ref: (1, 1, E)      f32, one positional-encoding row (no N broadcast)
    # o_ref : (1, tn, E)     f32
    x = x_ref[0]
    h = jnp.dot(x, w1_ref[...], preferred_element_type=jnp.float32)
    h = jnp.maximum(h + b1_ref[...], 0.0)                       # ReLU, f32
    h = h.astype(w2_ref.dtype)                                  # MXU in weight dtype
    emb = jnp.dot(h, w2_ref[...], preferred_element_type=jnp.float32)
    o_ref[0] = (emb + b2_ref[...] + pe_ref[0]).astype(o_ref.dtype)
    # TODO(synk): nn.Dropout is identity in eval mode; training-mode dropout is
    # intentionally not applied here.


def _choose_n_tile(n, target=512):
    """Column tile along the N (batch*time) axis.  Returns (tile, padded_n)."""
    if n <= target:
        return int(n), int(n)
    t = target - (target % 8) if target % 8 else target
    for cand in range(t, 7, -8):
        if n % cand == 0:
            return cand, int(n)
    # No clean divisor: pad N to a multiple of the tile (keeps the pipeline and
    # a bounded VMEM footprint instead of one giant unpipelined block).
    return t, ((n + t - 1) // t) * t


def positional_encoding_forward(x, w1_t, b1, w2_t, b2, pe, embed_dim,
                                compute_dtype=jnp.float32, n_tile_target=512):
    """x: (L, N, src_dim) f32; pe: (max_len, 1, embed_dim).
    Returns (L, N, embed_dim) f32."""
    L, N, src_dim = x.shape
    hid_dim = w1_t.shape[1]
    scale = math.sqrt(embed_dim)

    # Fold sqrt(embed_dim) into linear2 once (removes an in-kernel VPU multiply).
    w2_s = w2_t * scale
    b2_s = b2 * scale

    matmul_dtype = jnp.dtype(compute_dtype)
    if matmul_dtype != jnp.dtype(jnp.float32):
        x_c = x.astype(matmul_dtype)
        w1c = w1_t.astype(matmul_dtype)
        w2c = w2_s.astype(matmul_dtype)
    else:
        x_c, w1c, w2c = x, w1_t, w2_s

    b1_2d = b1.reshape(1, hid_dim).astype(jnp.float32)
    b2_2d = b2_s.reshape(1, embed_dim).astype(jnp.float32)
    pe_l = pe[:L].astype(jnp.float32)                            # (L, 1, E)

    tn, n_pad = _choose_n_tile(N, n_tile_target)
    if n_pad != N:
        x_c = jnp.pad(x_c, ((0, 0), (0, n_pad - N), (0, 0)))
    grid = (L, n_pad // tn)

    itemsize = matmul_dtype.itemsize
    flops = 2 * L * n_pad * (src_dim * hid_dim + hid_dim * embed_dim)
    bytes_accessed = int(L * n_pad * src_dim * itemsize
                         + (src_dim * hid_dim + hid_dim * embed_dim) * itemsize
                         + (hid_dim + embed_dim) * 4
                         + L * embed_dim * 4                     # pe, no N broadcast
                         + L * n_pad * embed_dim * 4)            # output write

    out = pl.pallas_call(
        _pe_kernel,
        out_shape=jax.ShapeDtypeStruct((L, n_pad, embed_dim), jnp.float32),
        grid_spec=pltpu.PrefetchScalarGridSpec(
            num_scalar_prefetch=0,
            grid=grid,
            in_specs=[
                pl.BlockSpec((1, tn, src_dim), lambda l, n: (l, n, 0)),
                pl.BlockSpec((src_dim, hid_dim), lambda l, n: (0, 0)),    # resident
                pl.BlockSpec((1, hid_dim), lambda l, n: (0, 0)),          # resident
                pl.BlockSpec((hid_dim, embed_dim), lambda l, n: (0, 0)),  # resident
                pl.BlockSpec((1, embed_dim), lambda l, n: (0, 0)),        # resident
                pl.BlockSpec((1, 1, embed_dim), lambda l, n: (l, 0, 0)),  # pe row
            ],
            out_specs=pl.BlockSpec((1, tn, embed_dim), lambda l, n: (l, n, 0)),
        ),
        compiler_params=pltpu.CompilerParams(
            dimension_semantics=("parallel", "parallel")),
        cost_estimate=pl.CostEstimate(flops=int(flops), transcendentals=0,
                                      bytes_accessed=bytes_accessed),
    )(x_c, w1c, b1_2d, w2c, b2_2d, pe_l)

    if n_pad != N:
        out = out[:, :N, :]
    return out


def make_sinusoidal_pe(max_len, embed_dim):
    """Matches the PyTorch buffer construction; shape (max_len, 1, embed_dim)."""
    position = jnp.arange(max_len, dtype=jnp.float32)[:, None]
    div_term = jnp.exp(jnp.arange(0, embed_dim, 2, dtype=jnp.float32)
                       * -(math.log(10000.0) / embed_dim))
    ang = position * div_term
    pe = jnp.zeros((max_len, embed_dim), dtype=jnp.float32)
    pe = pe.at[:, 0::2].set(jnp.sin(ang))
    pe = pe.at[:, 1::2].set(jnp.cos(ang))
    return pe[:, None, :]


def reference_pe(x, w1_t, b1, w2_t, b2, pe, embed_dim):
    h = jnp.maximum(x @ w1_t + b1, 0.0)
    emb = h @ w2_t + b2
    emb = emb * math.sqrt(embed_dim)
    return emb + pe[: x.shape[0]]


# ----------------------------------------------------------------------------
# MotionDecoder: fused (upsample + pad + masked conv1d + LeakyReLU) stack
# ----------------------------------------------------------------------------

def _upsample_pad_matrix(T, pad, padding_mode):
    """(Tp, T) matrix P with P @ x == pad(upsample_x2_linear(x)) on the time
    axis of a (T, C) time-major slab.  The upsample matches PyTorch
    nn.Upsample(scale_factor=2, mode='linear', align_corners=False)
    (src = max(0.5*(r+0.5) - 0.5, 0); lo = floor(src); hi = min(lo+1, T-1));
    padding is torch 'reflect' or zeros.  Built host-side (static shapes)."""
    T_up = 2 * T
    r = np.arange(T_up, dtype=np.float64)
    src = np.maximum(0.5 * (r + 0.5) - 0.5, 0.0)
    lo = np.minimum(np.floor(src).astype(np.int64), T - 1)
    hi = np.minimum(lo + 1, T - 1)
    w = src - lo
    U = np.zeros((T_up, T), dtype=np.float64)
    U[np.arange(T_up), lo] += 1.0 - w
    U[np.arange(T_up), hi] += w
    idx = np.arange(-pad, T_up + pad)
    if padding_mode == 'reflect':
        idx = np.abs(idx)
        idx = np.where(idx >= T_up, 2 * (T_up - 1) - idx, idx)
        P = U[idx]
    else:                                       # 'zeros' / 'constant'
        P = np.zeros((T_up + 2 * pad, T), dtype=np.float64)
        valid = (idx >= 0) & (idx < T_up)
        P[valid] = U[idx[valid]]
    return jnp.asarray(P, dtype=jnp.float32)


def _choose_batch_block(B, per_elem_bytes, target_bytes=512 * 1024):
    """Batch elements per grid step: amortize per-step overhead (>=~512 KB moved
    per step when possible) while keeping >=2 grid steps for v7x's 2 TCs."""
    divisors = [d for d in range(1, B + 1) if B % d == 0]
    chosen = divisors[-1]
    for d in divisors:
        if d * per_elem_bytes >= target_bytes:
            chosen = d
            break
    if chosen == B and B > 1:
        chosen = divisors[-2]
    return chosen


def _make_fused_decoder_kernel(n_layers, K, leaky_slope):
    def kernel(*refs):
        x_ref = refs[0]
        o_ref = refs[-1]
        layer_refs = refs[1:-1]                 # 3 refs per layer: P, Wf, b
        Bb = x_ref.shape[0]
        for b in range(Bb):                     # short static inner loop
            h = x_ref[b]                        # (T_i, Cin_i), time-major
            for i in range(n_layers):
                p_ref = layer_refs[3 * i]
                w_ref = layer_refs[3 * i + 1]
                b_ref = layer_refs[3 * i + 2]
                Tp = p_ref.shape[0]
                T_out = Tp - K + 1
                # Upsample(x2, linear, align_corners=False) + reflect/zeros pad
                # folded into one small MXU matmul with the precomputed matrix.
                hpu = jnp.dot(p_ref[...], h, preferred_element_type=jnp.float32)
                # im2col staging: one lane-concat buffer -> a single fused
                # (T_out, K*Cin) @ (K*Cin, Cout) matmul (one MXU push/drain
                # instead of K tiny dots; shifted slices realigned once).
                cat = jnp.concatenate(
                    [hpu[k:k + T_out, :] for k in range(K)], axis=1)
                h = jnp.dot(cat, w_ref[...],
                            preferred_element_type=jnp.float32) + b_ref[...]
                if i != n_layers - 1:
                    h = jnp.where(h >= 0, h, leaky_slope * h)   # LeakyReLU(0.2)
            o_ref[b] = h.astype(o_ref.dtype)
    return kernel


def motion_decoder_forward(x_bct, layer_params, *, padding, padding_mode,
                           add_offset=False, offset=None, is_lafan1=True,
                           batch_block=None):
    """x_bct: (B, C, T) as fed to MotionDecoder.forward.
    layer_params: list of (weight_masked (Cout, Cin, K), bias (Cout,)).
    For lafan1 the result is (B, T_final, Cout_last) == x.transpose(1, 2)."""
    if add_offset and offset is not None:
        x_bct = x_bct + offset / 100.0
    # Time-major (channels ride the lanes); one transpose of the smallest
    # activation replaces a transpose of the 2^n_layers-larger output.
    x = jnp.transpose(x_bct, (0, 2, 1)).astype(jnp.float32)      # (B, T0, C0)
    B, T0, C0 = x.shape
    K = int(layer_params[0][0].shape[2])
    n_layers = len(layer_params)

    # Host-side per-layer constants (static shapes); they stay VMEM-resident.
    p_mats, w_fused, biases = [], [], []
    T, Cin = T0, C0
    flops = 0
    for (w_masked, b) in layer_params:
        Cout = int(w_masked.shape[0])
        P = _upsample_pad_matrix(T, padding, padding_mode)       # (Tp, T)
        Tp = int(P.shape[0])
        T_out = Tp - K + 1
        wf = jnp.transpose(w_masked, (2, 1, 0)).reshape(K * Cin, Cout)
        p_mats.append(P)
        w_fused.append(wf.astype(jnp.float32))
        biases.append(b.reshape(1, Cout).astype(jnp.float32))
        flops += 2 * B * (Tp * T * Cin + T_out * K * Cin * Cout)
        T, Cin = T_out, Cout
    T_final, C_final = T, Cin

    const_bytes = 4 * sum(int(np.prod(a.shape))
                          for a in (p_mats + w_fused + biases))
    bytes_accessed = int(4 * B * (T0 * C0 + T_final * C_final) + const_bytes)

    per_elem_bytes = 4 * (T0 * C0 + T_final * C_final)
    Bb = batch_block if batch_block is not None else _choose_batch_block(
        B, per_elem_bytes)
    grid = (B // Bb,)

    # Explicit VMEM budget: double-buffered in/out blocks, resident constants,
    # and the largest per-batch-element intermediates (im2col buffer dominates).
    interm = 0
    Ci = C0
    for P, wf in zip(p_mats, w_fused):
        Tp = int(P.shape[0]); T_out = Tp - K + 1; Cout = int(wf.shape[1])
        interm = max(interm, 4 * (Tp * Ci + T_out * K * Ci + T_out * Cout))
        Ci = Cout
    vmem_est = (2 * 4 * Bb * (T0 * C0 + T_final * C_final)
                + 2 * const_bytes + 2 * Bb * interm)
    vmem_limit = int(min(64 * 2 ** 20, max(16 * 2 ** 20, 2 * vmem_est)))

    in_specs = [pl.BlockSpec((Bb, T0, C0), lambda g: (g, 0, 0))]
    layer_inputs = []
    for P, wf, b2 in zip(p_mats, w_fused, biases):
        in_specs.append(pl.BlockSpec(P.shape, lambda g: (0, 0)))     # resident
        in_specs.append(pl.BlockSpec(wf.shape, lambda g: (0, 0)))    # resident
        in_specs.append(pl.BlockSpec(b2.shape, lambda g: (0, 0)))    # resident
        layer_inputs += [P, wf, b2]

    out = pl.pallas_call(
        _make_fused_decoder_kernel(n_layers, K, 0.2),
        out_shape=jax.ShapeDtypeStruct((B, T_final, C_final), jnp.float32),
        grid_spec=pltpu.PrefetchScalarGridSpec(
            num_scalar_prefetch=0,
            grid=grid,
            in_specs=in_specs,
            out_specs=pl.BlockSpec((Bb, T_final, C_final), lambda g: (g, 0, 0)),
        ),
        compiler_params=pltpu.CompilerParams(
            dimension_semantics=("parallel",),
            vmem_limit_bytes=vmem_limit),
        cost_estimate=pl.CostEstimate(flops=int(flops), transcendentals=0,
                                      bytes_accessed=bytes_accessed),
    )(x, *layer_inputs)

    if is_lafan1:
        return out                         # already (B, T, C) == transpose(1, 2)
    # TODO(synk): non-lafan1 path (drop the appended channel) is untested here.
    return jnp.transpose(out, (0, 2, 1))[:, :-1, :]


def build_bodypart_mask(nparts, part_joints, in_channels, out_channels,
                        kernel_size, njoints, last_layer):
    """Builds BodyPartConv.mask for middle/last decoder layers (first_layer is
    only used by the encoder's residual conv)."""
    mask = np.zeros((out_channels, in_channels, kernel_size), dtype=np.float32)
    in_per_part = in_channels // nparts
    in_lists = [list(range(i * in_per_part, (i + 1) * in_per_part))
                for i in range(nparts)]
    if not last_layer:
        out_per_part = out_channels // nparts
        out_lists = [list(range(i * out_per_part, (i + 1) * out_per_part))
                     for i in range(nparts)]
    else:
        per_joint = out_channels // njoints
        out_lists = []
        for i in range(nparts):
            expanded = []
            for j in part_joints[i]:
                expanded.extend(range(j * per_joint, (j + 1) * per_joint))
            out_lists.append(expanded)
    for i in range(nparts):
        for j in out_lists[i]:
            mask[j, in_lists[i], :] = 1.0
    if last_layer:
        covered = set()
        for lst in out_lists:
            covered.update(lst)
        for k in range(out_channels):
            if k not in covered:
                mask[k, ...] = 1.0
    return jnp.asarray(mask)


# -------------------------- pure-JAX references ------------------------------

def upsample_linear_1d(x_btc, scale=2):
    """nn.Upsample(scale_factor=2, mode='linear', align_corners=False) on the
    time axis of a (B, T, C) tensor (gather-based; independent of the P-matrix
    construction used in the kernel, so it cross-checks it)."""
    B, T, C = x_btc.shape
    T_out = T * scale
    i = jnp.arange(T_out, dtype=jnp.float32)
    src = jnp.maximum((i + 0.5) / scale - 0.5, 0.0)
    lo = jnp.minimum(jnp.floor(src).astype(jnp.int32), T - 1)
    hi = jnp.minimum(lo + 1, T - 1)
    w_hi = src - lo.astype(jnp.float32)
    x_lo = jnp.take(x_btc, lo, axis=1)
    x_hi = jnp.take(x_btc, hi, axis=1)
    return (1.0 - w_hi)[None, :, None] * x_lo + w_hi[None, :, None] * x_hi


def reference_conv1d(x_bct, w, b, padding, padding_mode, leaky_slope):
    pad_mode = 'reflect' if padding_mode == 'reflect' else 'constant'
    xp = jnp.pad(x_bct, ((0, 0), (0, 0), (padding, padding)), mode=pad_mode)
    out = lax.conv_general_dilated(xp, w, window_strides=(1,), padding='VALID',
                                   dimension_numbers=('NCH', 'OIH', 'NCH'),
                                   precision=lax.Precision.HIGHEST)
    out = out + b[None, :, None]
    if leaky_slope is not None:
        out = jnp.where(out >= 0, out, leaky_slope * out)
    return out


def reference_decoder(x_bct, layer_params, padding, padding_mode,
                      add_offset=False, offset=None):
    if add_offset and offset is not None:
        x_bct = x_bct + offset / 100.0
    x = x_bct
    n = len(layer_params)
    for i, (w, b) in enumerate(layer_params):
        x = jnp.transpose(upsample_linear_1d(jnp.transpose(x, (0, 2, 1)), 2),
                          (0, 2, 1))
        x = reference_conv1d(x, w, b, padding, padding_mode,
                             None if i == n - 1 else 0.2)
    return jnp.transpose(x, (0, 2, 1))                  # lafan1 output


# ----------------------------------------------------------------------------
# Self-test
# ----------------------------------------------------------------------------

if __name__ == "__main__":
    key = jax.random.PRNGKey(0)
    (kx, kw1, kb1, kw2, kb2, kdx, koff, kdec) = jax.random.split(key, 8)

    # ---------------- PositionalEncoding (joint_pos_encoder) -----------------
    L, N = 8, 2
    src_dim, hid_dim, embed_dim, max_len = 16, 32, 32, 100

    x = jax.random.normal(kx, (L, N, src_dim), dtype=jnp.float32)
    lim1 = 1.0 / math.sqrt(src_dim)
    lim2 = 1.0 / math.sqrt(hid_dim)
    w1_t = jax.random.uniform(kw1, (src_dim, hid_dim), jnp.float32, -lim1, lim1)
    b1 = jax.random.uniform(kb1, (hid_dim,), jnp.float32, -lim1, lim1)
    w2_t = jax.random.uniform(kw2, (hid_dim, embed_dim), jnp.float32, -lim2, lim2)
    b2 = jax.random.uniform(kb2, (embed_dim,), jnp.float32, -lim2, lim2)
    pe = make_sinusoidal_pe(max_len, embed_dim)

    out = positional_encoding_forward(x, w1_t, b1, w2_t, b2, pe, embed_dim)
    out = jax.block_until_ready(out)
    ref = reference_pe(x, w1_t, b1, w2_t, b2, pe, embed_dim)
    assert out.shape == (L, N, embed_dim)
    assert jnp.allclose(out, ref, atol=1e-5, rtol=1e-5), "PE f32 mismatch"

    # bf16 matmul path (HBM-bound optimization), f32 accumulation + epilogue.
    out_bf16 = jax.block_until_ready(
        positional_encoding_forward(x, w1_t, b1, w2_t, b2, pe, embed_dim,
                                    compute_dtype=jnp.bfloat16))
    assert jnp.allclose(out_bf16, ref, atol=4e-2, rtol=4e-2), "PE bf16 mismatch"

    # ---------------------------- MotionDecoder ------------------------------
    nparts, njoints, src = 3, 5, 4
    part_joints = [[0, 1], [1, 2, 3], [3, 4]]
    latent = 16
    conv_input_dim = latent * nparts          # 48
    raw_input_dim = njoints * src             # 20
    kernel_size, conv_layers = 3, 2
    padding = (kernel_size - 1) // 2
    padding_mode = 'reflect'
    B, T = 2, 8

    layer_params = []
    in_ch = conv_input_dim
    pk = kdec
    for i in range(conv_layers):
        last = (i == conv_layers - 1)
        out_ch = raw_input_dim if last else conv_input_dim
        pk, kw, kb = jax.random.split(pk, 3)
        bound = 1.0 / math.sqrt(in_ch * kernel_size)
        w = jax.random.uniform(kw, (out_ch, in_ch, kernel_size), jnp.float32,
                               -bound, bound)
        b = jax.random.uniform(kb, (out_ch,), jnp.float32, -bound, bound)
        m = build_bodypart_mask(nparts, part_joints, in_ch, out_ch,
                                kernel_size, njoints, last)
        layer_params.append((w * m, b))       # weight_masked = weight * mask
        in_ch = out_ch

    x_dec = jax.random.normal(kdx, (B, conv_input_dim, T), dtype=jnp.float32)
    offset = jax.random.normal(koff, (B, conv_input_dim, T), dtype=jnp.float32)

    out_dec = motion_decoder_forward(x_dec, layer_params, padding=padding,
                                     padding_mode=padding_mode,
                                     add_offset=True, offset=offset,
                                     is_lafan1=True)
    out_dec = jax.block_until_ready(out_dec)
    ref_dec = reference_decoder(x_dec, layer_params, padding, padding_mode,
                                add_offset=True, offset=offset)
    assert out_dec.shape == (B, T * 4, raw_input_dim), out_dec.shape
    assert jnp.allclose(out_dec, ref_dec, atol=1e-4, rtol=1e-4), "decoder mismatch"

    print("KERNEL_OK")
</pallas_src>

<mosaic_0001>
module attributes {stable_mosaic.version = 11 : i64} {
  func.func @_pe_kernel(%arg0: i32, %arg1: i32, %arg2: memref<1x2x16xf32, #tpu.memory_space<vmem>>, %arg3: memref<16x32xf32, #tpu.memory_space<vmem>>, %arg4: memref<1x32xf32, #tpu.memory_space<vmem>>, %arg5: memref<32x32xf32, #tpu.memory_space<vmem>>, %arg6: memref<1x32xf32, #tpu.memory_space<vmem>>, %arg7: memref<1x1x32xf32, #tpu.memory_space<vmem>>, %arg8: memref<1x2x32xf32, #tpu.memory_space<vmem>>) attributes {dimension_semantics = [#tpu.dimension_semantics<parallel>, #tpu.dimension_semantics<parallel>], iteration_bounds = array<i64: 8, 1>, scalar_prefetch = 0 : i64, scratch_operands = 0 : i64, tpu.core_type = #tpu.core_type<tc>, window_params = [{transform_indices = @transform_0, window_bounds = array<i64: 1, 2, 16>}, {pipeline_mode = #tpu.pipeline_mode<synchronous>, transform_indices = @transform_1, window_bounds = array<i64: 16, 32>}, {pipeline_mode = #tpu.pipeline_mode<synchronous>, transform_indices = @transform_2, window_bounds = array<i64: 1, 32>}, {pipeline_mode = #tpu.pipeline_mode<synchronous>, transform_indices = @transform_3, window_bounds = array<i64: 32, 32>}, {pipeline_mode = #tpu.pipeline_mode<synchronous>, transform_indices = @transform_4, window_bounds = array<i64: 1, 32>}, {transform_indices = @transform_5, window_bounds = array<i64: 1, 1, 32>}, {transform_indices = @transform_6, window_bounds = array<i64: 1, 2, 32>}]} {
    %c0 = arith.constant 0 : index
    %c0_0 = arith.constant 0 : index
    %c0_1 = arith.constant 0 : index
    %0 = vector.load %arg2[%c0, %c0_0, %c0_1] : memref<1x2x16xf32, #tpu.memory_space<vmem>>, vector<1x2x16xf32>
    %1 = vector.shape_cast %0 : vector<1x2x16xf32> to vector<2x16xf32>
    %c0_2 = arith.constant 0 : index
    %c0_3 = arith.constant 0 : index
    %2 = vector.load %arg3[%c0_2, %c0_3] : memref<16x32xf32, #tpu.memory_space<vmem>>, vector<16x32xf32>
    %cst = arith.constant dense<0.000000e+00> : vector<2x32xf32>
    %3 = tpu.matmul %1, %2, %cst {dimension_numbers = #tpu.dot_dimension_numbers<[1], [0], [0], [1], [0, 0, 1, 1], [], []>} : vector<2x16xf32>, vector<16x32xf32>, vector<2x32xf32> -> vector<2x32xf32>
    %c0_4 = arith.constant 0 : index
    %c0_5 = arith.constant 0 : index
    %4 = vector.load %arg4[%c0_4, %c0_5] : memref<1x32xf32, #tpu.memory_space<vmem>>, vector<1x32xf32>
    %5 = vector.broadcast %4 : vector<1x32xf32> to vector<2x32xf32>
    %6 = arith.addf %3, %5 : vector<2x32xf32>
    %cst_6 = arith.constant 0.000000e+00 : f32
    %7 = vector.broadcast %cst_6 : f32 to vector<2x32xf32>
    %8 = arith.maximumf %6, %7 : vector<2x32xf32>
    %c0_7 = arith.constant 0 : index
    %c0_8 = arith.constant 0 : index
    %9 = vector.load %arg5[%c0_7, %c0_8] : memref<32x32xf32, #tpu.memory_space<vmem>>, vector<32x32xf32>
    %cst_9 = arith.constant dense<0.000000e+00> : vector<2x32xf32>
    %10 = tpu.matmul %8, %9, %cst_9 {dimension_numbers = #tpu.dot_dimension_numbers<[1], [0], [0], [1], [0, 0, 1, 1], [], []>} : vector<2x32xf32>, vector<32x32xf32>, vector<2x32xf32> -> vector<2x32xf32>
    %c0_10 = arith.constant 0 : index
    %c0_11 = arith.constant 0 : index
    %11 = vector.load %arg6[%c0_10, %c0_11] : memref<1x32xf32, #tpu.memory_space<vmem>>, vector<1x32xf32>
    %12 = vector.broadcast %11 : vector<1x32xf32> to vector<2x32xf32>
    %13 = arith.addf %10, %12 : vector<2x32xf32>
    %c0_12 = arith.constant 0 : index
    %c0_13 = arith.constant 0 : index
    %c0_14 = arith.constant 0 : index
    %14 = vector.load %arg7[%c0_12, %c0_13, %c0_14] : memref<1x1x32xf32, #tpu.memory_space<vmem>>, vector<1x1x32xf32>
    %15 = vector.shape_cast %14 : vector<1x1x32xf32> to vector<1x32xf32>
    %16 = vector.broadcast %15 : vector<1x32xf32> to vector<2x32xf32>
    %17 = arith.addf %13, %16 : vector<2x32xf32>
    %c0_15 = arith.constant 0 : index
    %c0_16 = arith.constant 0 : index
    %c0_17 = arith.constant 0 : index
    %18 = vector.load %arg8[%c0_15, %c0_16, %c0_17] : memref<1x2x32xf32, #tpu.memory_space<vmem>>, vector<1x2x32xf32>
    %19 = vector.shape_cast %18 : vector<1x2x32xf32> to vector<2x32xf32>
    %20 = vector.shape_cast %17 : vector<2x32xf32> to vector<1x2x32xf32>
    tpu.vector_store %arg8[%c0_15, %c0_16, %c0_17], %20 {strides = array<i32>} : memref<1x2x32xf32, #tpu.memory_space<vmem>>, vector<1x2x32xf32>,
    return
  }
  func.func @transform_0(%arg0: i32, %arg1: i32) -> (i32, i32, i32) {
    %c0_i32 = arith.constant 0 : i32
    %c0_i32_0 = arith.constant 0 : i32
    return %arg0, %arg1, %c0_i32 : i32, i32, i32
  }
  func.func @transform_1(%arg0: i32, %arg1: i32) -> (i32, i32) {
    %c0_i32 = arith.constant 0 : i32
    %c0_i32_0 = arith.constant 0 : i32
    %c0_i32_1 = arith.constant 0 : i32
    return %c0_i32, %c0_i32_0 : i32, i32
  }
  func.func @transform_2(%arg0: i32, %arg1: i32) -> (i32, i32) {
    %c0_i32 = arith.constant 0 : i32
    %c0_i32_0 = arith.constant 0 : i32
    %c0_i32_1 = arith.constant 0 : i32
    return %c0_i32, %c0_i32_0 : i32, i32
  }
  func.func @transform_3(%arg0: i32, %arg1: i32) -> (i32, i32) {
    %c0_i32 = arith.constant 0 : i32
    %c0_i32_0 = arith.constant 0 : i32
    %c0_i32_1 = arith.constant 0 : i32
    return %c0_i32, %c0_i32_0 : i32, i32
  }
  func.func @transform_4(%arg0: i32, %arg1: i32) -> (i32, i32) {
    %c0_i32 = arith.constant 0 : i32
    %c0_i32_0 = arith.constant 0 : i32
    %c0_i32_1 = arith.constant 0 : i32
    return %c0_i32, %c0_i32_0 : i32, i32
  }
  func.func @transform_5(%arg0: i32, %arg1: i32) -> (i32, i32, i32) {
    %c0_i32 = arith.constant 0 : i32
    %c0_i32_0 = arith.constant 0 : i32
    %c0_i32_1 = arith.constant 0 : i32
    return %arg0, %c0_i32, %c0_i32_0 : i32, i32, i32
  }
  func.func @transform_6(%arg0: i32, %arg1: i32) -> (i32, i32, i32) {
    %c0_i32 = arith.constant 0 : i32
    %c0_i32_0 = arith.constant 0 : i32
    return %arg0, %arg1, %c0_i32 : i32, i32, i32
  }
}

</mosaic_0001>

<llo_original>
// kernel: tpu_custom_call.1
$region0: #{tpu_custom_call.1}
  #allocation0 [shape = 'u32[]', space=smem, size = 0x4, offset = 0x4, fixed_abs, tag = 'smem constant byte address 0x4 - core index']
  #allocation1 [shape = 'u32[144,128]{1,0:T(1,128)}', space=vmem, size = 0x12000, scoped, tag = 'internal scratch']
  %s0 = inlined_call_operand.hbm [shape: f32[8,2,16], index: 0, kind: input, shape index: {}]
  %s1 = inlined_call_operand.hbm [shape: f32[16,32], index: 1, kind: input, shape index: {}]
  %s2 = inlined_call_operand.vmem [shape: f32[1,32], index: 2, kind: input, shape index: {}]
  %s3 = inlined_call_operand.hbm [shape: f32[32,32], index: 3, kind: input, shape index: {}]
  %s4 = inlined_call_operand.vmem [shape: f32[1,32], index: 4, kind: input, shape index: {}]
  %s5 = inlined_call_operand.vmem [shape: f32[8,1,32], index: 5, kind: input, shape index: {}]
  %s6 = inlined_call_operand.hbm [shape: f32[8,2,32], index: 6, kind: output, shape index: {}]
  %s7 = sld [smem:[#allocation0]]
  $region69: #{tpu_custom_call.1} parent=0
    _
  %s9 = ssub.s32 1, %s7
  %s10 = scalar_select 0, %s9, %s7
  $region1: #{tpu_custom_call.1} parent=0
    #allocation2 [shape = 'u8[2048]{0}', space=vmem, size = 0x800, scoped, tag = 'input window, operand 0']
    #allocation3 [shape = 's32[2]{0}', space=sflag, size = 0x8, scoped, tag = 'scoped memory for tpu_custom_call.1']
    #allocation4 [shape = 's32[2]{0}', space=sflag, size = 0x8, scoped, tag = 'scoped memory for tpu_custom_call.1']
    #allocation5 [shape = 'u8[8192]{0}', space=vmem, size = 0x2000, scoped, tag = 'input window, operand 1, single buffered']
    #allocation6 [shape = 's32[1]{0}', space=sflag, size = 0x4, scoped, tag = 'scoped memory for tpu_custom_call.1']
    #allocation7 [shape = 'u8[16384]{0}', space=vmem, size = 0x4000, scoped, tag = 'input window, operand 3, single buffered']
    #allocation8 [shape = 'u8[2048]{0}', space=vmem, size = 0x800, scoped, tag = 'output window, operand 0']
    %11 = vsyncpa [#allocation3], 0
    %s12 = scalar_lea.sflag [#allocation3], 1
    %13 = vsyncpa %s12, 0
    %14 = vsyncpa [#allocation6], 0
    %15 = vsyncpa [#allocation4], 0
    %s16 = scalar_lea.sflag [#allocation4], 1
    %17 = vsyncpa %s16, 0
    loop: start=0, step=1, limit=10
    $region2: #{tpu_custom_call.1} parent=1 // loop_pre_header
      _
    $region3: #{tpu_custom_call.1} parent=1 // loop_header
      %s19 = sphi 0, %s23
      %p20 = scmp.ge.s32.totalorder %s19, 10
      %s26 = sphi 0, %s38
      %s27 = sphi 0, %s34
      %s28 = sphi 0, %s26
      %s29 = sphi 0, %s27
      %s30 = sphi 0, %s28
      %s31 = sphi 0, %s29
      %s43 = sphi 0, %s45
      %s46 = sphi 0, %s43
      %s47 = sphi 0, %s46
      %s63 = sphi 0, %s47
      %s67 = sphi 0, %s67
      %s69 = sphi 0, %s67
      %s70 = sphi 0, %s69
      %s84 = sphi 0, %s70
      %s88 = sphi 0, %s88
      %s90 = sphi 0, %s88
      %s91 = sphi 0, %s90
      %s105 = sphi 0, %s91
      %s109 = sphi 0, %s109
      %s111 = sphi 0, %s109
      %s112 = sphi 0, %s111
      %s126 = sphi 0, %s112
      %s130 = sphi 0, %s130
      %s132 = sphi 0, %s130
      %s133 = sphi 0, %s132
      %s147 = sphi 0, %s133
      %s153 = sphi 0, %s155
      %s156 = sphi 0, %s153
      %s157 = sphi 0, %s156
      %s173 = sphi 0, %s157
      %s181 = sphi 0, %s183
      %s184 = sphi 0, %s181
      %s185 = sphi 0, %s184
      %s201 = sphi 0, %s185
    $region4: #{tpu_custom_call.1} parent=1 // loop_header_branch
      %22 = sbr.rel (%p20) target = $region8
    $region5: #{tpu_custom_call.1} parent=1 // loop_body
      %s24 = ssub.s32 %s19, 1
      %s25 = ssub.s32 %s19, 2
      %s32 = sadd.s32 1, %s27
      %p33 = scmp.ge.s32.totalorder %s32, 1
      %s34 = scalar_select %p33, 0, %s32
      %s35 = sadd.s32 1, %s26
      %s36 = scalar_select %p33, %s35, %s26
      %p37 = scmp.ge.s32.totalorder %s36, 8
      %s38 = scalar_select %p37, 0, %s36
      %s39 = ssub.s32 %s26, %s38
      %s40 = ssub.s32 %s27, %s34
      %s41 = sor.u32 %s39, %s40
      %p42 = scmp.eq.s32.totalorder %s41, 0
      %s44 = sadd.s32 %s43, 1
      %s45 = scalar_select %p42, %s43, %s44
      %p48 = pneg %p42
      %p49 = scmp.eq.s32.totalorder %s19, 7
      %p50 = por %p48, %p49
      %p51 = scmp.ne.s32.totalorder %s43, %s46
      %p52 = scmp.eq.s32.totalorder %s19, 0
      %p53 = por %p51, %p52
      %p54 = scmp.ne.s32.totalorder %s43, %s46
      %p55 = scmp.eq.s32.totalorder %s24, 7
      %p56 = por %p54, %p55
      %p57 = scmp.ne.s32.totalorder %s46, %s47
      %p58 = scmp.eq.s32.totalorder %s24, 0
      %p59 = por %p57, %p58
      %p60 = scmp.ne.s32.totalorder %s46, %s47
      %p61 = scmp.eq.s32.totalorder %s25, 7
      %p62 = por %p60, %p61
      %p64 = scmp.ne.s32.totalorder %s47, %s63
      %p65 = scmp.eq.s32.totalorder %s25, 0
      %p66 = por %p64, %p65
      %s68 = sadd.s32 %s67, 1
      %p71 = scmp.eq.s32.totalorder %s19, 7
      %p72 = scmp.ne.s32.totalorder %s67, %s69
      %p73 = scmp.eq.s32.totalorder %s19, 0
      %p74 = por %p72, %p73
      %p75 = scmp.ne.s32.totalorder %s67, %s69
      %p76 = scmp.eq.s32.totalorder %s24, 7
      %p77 = por %p75, %p76
      %p78 = scmp.ne.s32.totalorder %s69, %s70
      %p79 = scmp.eq.s32.totalorder %s24, 0
      %p80 = por %p78, %p79
      %p81 = scmp.ne.s32.totalorder %s69, %s70
      %p82 = scmp.eq.s32.totalorder %s25, 7
      %p83 = por %p81, %p82
      %p85 = scmp.ne.s32.totalorder %s70, %s84
      %p86 = scmp.eq.s32.totalorder %s25, 0
      %p87 = por %p85, %p86
      %s89 = sadd.s32 %s88, 1
      %p92 = scmp.eq.s32.totalorder %s19, 7
      %p93 = scmp.ne.s32.totalorder %s88, %s90
      %p94 = scmp.eq.s32.totalorder %s19, 0
      %p95 = por %p93, %p94
      %p96 = scmp.ne.s32.totalorder %s88, %s90
      %p97 = scmp.eq.s32.totalorder %s24, 7
      %p98 = por %p96, %p97
      %p99 = scmp.ne.s32.totalorder %s90, %s91
      %p100 = scmp.eq.s32.totalorder %s24, 0
      %p101 = por %p99, %p100
      %p102 = scmp.ne.s32.totalorder %s90, %s91
      %p103 = scmp.eq.s32.totalorder %s25, 7
      %p104 = por %p102, %p103
      %p106 = scmp.ne.s32.totalorder %s91, %s105
      %p107 = scmp.eq.s32.totalorder %s25, 0
      %p108 = por %p106, %p107
      %s110 = sadd.s32 %s109, 1
      %p113 = scmp.eq.s32.totalorder %s19, 7
      %p114 = scmp.ne.s32.totalorder %s109, %s111
      %p115 = scmp.eq.s32.totalorder %s19, 0
      %p116 = por %p114, %p115
      %p117 = scmp.ne.s32.totalorder %s109, %s111
      %p118 = scmp.eq.s32.totalorder %s24, 7
      %p119 = por %p117, %p118
      %p120 = scmp.ne.s32.totalorder %s111, %s112
      %p121 = scmp.eq.s32.totalorder %s24, 0
      %p122 = por %p120, %p121
      %p123 = scmp.ne.s32.totalorder %s111, %s112
      %p124 = scmp.eq.s32.totalorder %s25, 7
      %p125 = por %p123, %p124
      %p127 = scmp.ne.s32.totalorder %s112, %s126
      %p128 = scmp.eq.s32.totalorder %s25, 0
      %p129 = por %p127, %p128
      %s131 = sadd.s32 %s130, 1
      %p134 = scmp.eq.s32.totalorder %s19, 7
      %p135 = scmp.ne.s32.totalorder %s130, %s132
      %p136 = scmp.eq.s32.totalorder %s19, 0
      %p137 = por %p135, %p136
      %p138 = scmp.ne.s32.totalorder %s130, %s132
      %p139 = scmp.eq.s32.totalorder %s24, 7
      %p140 = por %p138, %p139
      %p141 = scmp.ne.s32.totalorder %s132, %s133
      %p142 = scmp.eq.s32.totalorder %s24, 0
      %p143 = por %p141, %p142
      %p144 = scmp.ne.s32.totalorder %s132, %s133
      %p145 = scmp.eq.s32.totalorder %s25, 7
      %p146 = por %p144, %p145
      %p148 = scmp.ne.s32.totalorder %s133, %s147
      %p149 = scmp.eq.s32.totalorder %s25, 0
      %p150 = por %p148, %p149
      %s151 = ssub.s32 %s26, %s38
      %p152 = scmp.eq.s32.totalorder %s151, 0
      %s154 = sadd.s32 %s153, 1
      %s155 = scalar_select %p152, %s153, %s154
      %p158 = pneg %p152
      %p159 = scmp.eq.s32.totalorder %s19, 7
      %p160 = por %p158, %p159
      %p161 = scmp.ne.s32.totalorder %s153, %s156
      %p162 = scmp.eq.s32.totalorder %s19, 0
      %p163 = por %p161, %p162
      %p164 = scmp.ne.s32.totalorder %s153, %s156
      %p165 = scmp.eq.s32.totalorder %s24, 7
      %p166 = por %p164, %p165
      %p167 = scmp.ne.s32.totalorder %s156, %s157
      %p168 = scmp.eq.s32.totalorder %s24, 0
      %p169 = por %p167, %p168
      %p170 = scmp.ne.s32.totalorder %s156, %s157
      %p171 = scmp.eq.s32.totalorder %s25, 7
      %p172 = por %p170, %p171
      %p174 = scmp.ne.s32.totalorder %s157, %s173
      %p175 = scmp.eq.s32.totalorder %s25, 0
      %p176 = por %p174, %p175
      %s177 = ssub.s32 %s26, %s38
      %s178 = ssub.s32 %s27, %s34
      %s179 = sor.u32 %s177, %s178
      %p180 = scmp.eq.s32.totalorder %s179, 0
      %s182 = sadd.s32 %s181, 1
      %s183 = scalar_select %p180, %s181, %s182
      %p186 = pneg %p180
      %p187 = scmp.eq.s32.totalorder %s19, 7
      %p188 = por %p186, %p187
      %p189 = scmp.ne.s32.totalorder %s181, %s184
      %p190 = scmp.eq.s32.totalorder %s19, 0
      %p191 = por %p189, %p190
      %p192 = scmp.ne.s32.totalorder %s181, %s184
      %p193 = scmp.eq.s32.totalorder %s24, 7
      %p194 = por %p192, %p193
      %p195 = scmp.ne.s32.totalorder %s184, %s185
      %p196 = scmp.eq.s32.totalorder %s24, 0
      %p197 = por %p195, %p196
      %p198 = scmp.ne.s32.totalorder %s184, %s185
      %p199 = scmp.eq.s32.totalorder %s25, 7
      %p200 = por %p198, %p199
      %p202 = scmp.ne.s32.totalorder %s185, %s201
      %p203 = scmp.eq.s32.totalorder %s25, 0
      %p204 = por %p202, %p203
      %p205 = scmp.le.s32.totalorder 1, %s19
      %p206 = scmp.lt.s32.totalorder %s19, 9
      %p207 = pnand %p205, %p206
      %p208 = pneg %p207
      // Predicated region
      $region9: #{tpu_custom_call.1} parent=5 // pred_check
        _
      $region10: #{tpu_custom_call.1} parent=5 // pred_check_branch
        %210 = sbr.rel (%p207) target = $region12
      $region11: #{tpu_custom_call.1} parent=5 // pred_region
        %s211 = ssub.s32 %s19, 1
        // Predicated region
        $region13: #{tpu_custom_call.1} parent=11 // pred_check
          %p212 = pneg %p80
        $region14: #{tpu_custom_call.1} parent=11 // pred_check_branch
          %214 = sbr.rel (%p212) target = $region16
        $region15: #{tpu_custom_call.1} parent=11 // pred_region
          %s216 = ssub.s32 256, 256
          %217 = vsyncadd [#allocation6], %s216
          %s218 = sshll.u32 [#allocation5], 4
          %s219 = int_to_ptr.vmem [resolvable:$true] %s218
          %224 = dma.hbm_to_vmem [thread:$0]  %s1, 256, %s219, [#allocation6], 128, 128, 8
        $region16: #{tpu_custom_call.1} parent=11 // pred_fallthru
          _
        // Predicated region
        $region17: #{tpu_custom_call.1} parent=11 // pred_check
          %p225 = pneg %p101
        $region18: #{tpu_custom_call.1} parent=11 // pred_check_branch
          %227 = sbr.rel (%p225) target = $region20
        $region19: #{tpu_custom_call.1} parent=11 // pred_region
          _
        $region20: #{tpu_custom_call.1} parent=11 // pred_fallthru
          _
        // Predicated region
        $region21: #{tpu_custom_call.1} parent=11 // pred_check
          %p228 = pneg %p122
        $region22: #{tpu_custom_call.1} parent=11 // pred_check_branch
          %230 = sbr.rel (%p228) target = $region24
        $region23: #{tpu_custom_call.1} parent=11 // pred_region
          %s232 = ssub.s32 512, 512
          %233 = vsyncadd [#allocation6], %s232
          %s234 = sshll.u32 [#allocation7], 4
          %s235 = int_to_ptr.vmem [resolvable:$true] %s234
          %240 = dma.hbm_to_vmem [thread:$0]  %s3, 512, %s235, [#allocation6], 128, 128, 8
        $region24: #{tpu_custom_call.1} parent=11 // pred_fallthru
          _
        // Predicated region
        $region25: #{tpu_custom_call.1} parent=11 // pred_check
          %p241 = pneg %p143
        $region26: #{tpu_custom_call.1} parent=11 // pred_check_branch
          %243 = sbr.rel (%p241) target = $region28
        $region27: #{tpu_custom_call.1} parent=11 // pred_region
          _
        $region28: #{tpu_custom_call.1} parent=11 // pred_fallthru
          _
      $region12: #{tpu_custom_call.1} parent=5 // pred_fallthru
        _
      %p244 = scmp.lt.s32.totalorder %s19, 8
      // Predicated region
      $region29: #{tpu_custom_call.1} parent=5 // pred_check
        %p245 = pneg %p244
      $region30: #{tpu_custom_call.1} parent=5 // pred_check_branch
        %247 = sbr.rel (%p245) target = $region32
      $region31: #{tpu_custom_call.1} parent=5 // pred_region
        // Predicated region
        $region33: #{tpu_custom_call.1} parent=31 // pred_check
          %p248 = pneg %p53
        $region34: #{tpu_custom_call.1} parent=31 // pred_check_branch
          %250 = sbr.rel (%p248) target = $region36
        $region35: #{tpu_custom_call.1} parent=31 // pred_region
          %s251 = sand.u32 %s43, 1
          %s252 = scalar_lea.sflag [#allocation3], %s251
          %s253 = sand.u32 %s43, 1
          %s254 = smul.addr %s253, 2
          %s255 = scalar_lea.vmem [#allocation2], %s254
          %s257 = ssub.s32 32, 32
          %258 = vsyncadd %s252, %s257
          %s259 = sadd.s32 %s27, %s26
          %s260 = smul.addr %s259, 32
          %s261 = scalar_lea.hbm %s0, %s260
          %s263 = sshll.u32 %s255, 4
          %s264 = int_to_ptr.vmem [resolvable:$true] %s263
          %266 = dma.hbm_to_vmem [thread:$0]  %s261, 32, %s264, %s252
        $region36: #{tpu_custom_call.1} parent=31 // pred_fallthru
          _
        // Predicated region
        $region37: #{tpu_custom_call.1} parent=31 // pred_check
          %p267 = pneg %p163
        $region38: #{tpu_custom_call.1} parent=31 // pred_check_branch
          %269 = sbr.rel (%p267) target = $region40
        $region39: #{tpu_custom_call.1} parent=31 // pred_region
          %p270 = scmp.lt.s32.totalorder %s26, 7
          %s271 = scalar_select %p270, %s26, 7
          %s272 = scalar_lea.vmem %s5, %s271
        $region40: #{tpu_custom_call.1} parent=31 // pred_fallthru
          _
      $region32: #{tpu_custom_call.1} parent=5 // pred_fallthru
        _
      %p273 = scmp.le.s32.totalorder 1, %s19
      %p274 = scmp.lt.s32.totalorder %s19, 9
      %p275 = pnand %p273, %p274
      %p276 = pneg %p275
      // Predicated region
      $region41: #{tpu_custom_call.1} parent=5 // pred_check
        _
      $region42: #{tpu_custom_call.1} parent=5 // pred_check_branch
        %278 = sbr.rel (%p275) target = $region44
      $region43: #{tpu_custom_call.1} parent=5 // pred_region
        %s279 = ssub.s32 %s19, 1
        %s280 = sand.u32 %s46, 1
        %s281 = scalar_lea.sflag [#allocation3], %s280
        %s282 = sand.u32 %s46, 1
        %s283 = smul.addr %s282, 2
        %s284 = scalar_lea.vmem [#allocation2], %s283
        // Predicated region
        $region45: #{tpu_custom_call.1} parent=43 // pred_check
          %p285 = pneg %p59
        $region46: #{tpu_custom_call.1} parent=43 // pred_check_branch
          %287 = sbr.rel (%p285) target = $region48
        $region47: #{tpu_custom_call.1} parent=43 // pred_region
          %288 = dma.done %s281, 32
        $region48: #{tpu_custom_call.1} parent=43 // pred_fallthru
          _
        // Predicated region
        $region49: #{tpu_custom_call.1} parent=43 // pred_check
          %p289 = pneg %p80
        $region50: #{tpu_custom_call.1} parent=43 // pred_check_branch
          %291 = sbr.rel (%p289) target = $region52
        $region51: #{tpu_custom_call.1} parent=43 // pred_region
          %292 = dma.done [#allocation6], 256
        $region52: #{tpu_custom_call.1} parent=43 // pred_fallthru
          _
        // Predicated region
        $region53: #{tpu_custom_call.1} parent=43 // pred_check
          %p293 = pneg %p122
        $region54: #{tpu_custom_call.1} parent=43 // pred_check_branch
          %295 = sbr.rel (%p293) target = $region56
        $region55: #{tpu_custom_call.1} parent=43 // pred_region
          %296 = dma.done [#allocation6], 512
        $region56: #{tpu_custom_call.1} parent=43 // pred_fallthru
          _
        %s297 = sand.u32 %s46, 1
        %s298 = scalar_lea.sflag [#allocation3], %s297
        %s299 = sand.u32 %s46, 1
        %s300 = smul.addr %s299, 2
        %s301 = scalar_lea.vmem [#allocation2], %s300
        %p302 = pneg %p59
        %p303 = pneg %p56
        %p304 = pneg %p80
        %p305 = pneg %p77
        %p306 = pneg %p101
        %p307 = pneg %p98
        %p308 = pneg %p122
        %p309 = pneg %p119
        %p310 = pneg %p143
        %p311 = pneg %p140
        %p312 = scmp.lt.s32.totalorder %s28, 7
        %s313 = scalar_select %p312, %s28, 7
        %s314 = scalar_lea.vmem %s5, %s313
        %p315 = pneg %p169
        %p316 = pneg %p166
        %p317 = pneg %p197
        %p318 = pneg %p194
        %s319 = sand.u32 %s184, 1
        %s320 = scalar_lea.sflag [#allocation4], %s319
        %s321 = sand.u32 %s184, 1
        %s322 = smul.addr %s321, 2
        %s323 = scalar_lea.vmem [#allocation8], %s322
        %p324 = scmp.lt.s32.totalorder %s28, 7
        %s325 = scalar_select %p324, %s28, 7
        %s326 = scalar_lea.vmem %s5, %s325
        %v327 = vld [vmem:[%s284] sm:$0x3]
        %v328 = vld [vmem:[#allocation5] sm:$0xff]
        %v329 = vld [vmem:[#allocation5 + $0x8] sm:$0xff]
        %v330 = vld [vmem:[%s2] sm:$0x1]
        %v332 = vlaneseq
        %v333 = vshrl.u32 %v332, 7
        %v334 = vsub.s32 0, %v333
        %v335 = vrot.slane %v330, %v334
        %vm337 = vcmask 130048
        %v339 = vsel %vm337, %v327, 0
        %341 = vmatprep.subr.mxu0 0.0
        %342 = vmatpush1.msra.mxu0 %v328
        %343 = vmatprep.subr.mxu0 0.0
        %344 = vmatpush1.msra.mxu0 %v329
        %345 = vmatprep.subr.mxu0 0.0
        %346 = vmatpush1.msra.mxu0 0.0
        %347 = vmatprep.subr.mxu0 0.0
        %348 = vmatpush1.msra.mxu0 0.0
        %349 = vmatprep.subr.mxu0 0.0
        %350 = vmatpush1.msra.mxu0 0.0
        %351 = vmatprep.subr.mxu0 0.0
        %352 = vmatpush1.msra.mxu0 0.0
        %353 = vmatprep.subr.mxu0 0.0
        %354 = vmatpush1.msra.mxu0 0.0
        %355 = vmatprep.subr.mxu0 0.0
        %356 = vmatpush1.msra.mxu0 0.0
        %357 = vmatprep.subr.mxu0 0.0
        %358 = vmatpush1.msra.mxu0 0.0
        %359 = vmatprep.subr.mxu0 0.0
        %360 = vmatpush1.msra.mxu0 0.0
        %361 = vmatprep.subr.mxu0 0.0
        %362 = vmatpush1.msra.mxu0 0.0
        %363 = vmatprep.subr.mxu0 0.0
        %364 = vmatpush1.msra.mxu0 0.0
        %365 = vmatprep.subr.mxu0 0.0
        %366 = vmatpush1.msra.mxu0 0.0
        %367 = vmatprep.subr.mxu0 0.0
        %368 = vmatpush1.msra.mxu0 0.0
        %369 = vmatprep.subr.mxu0 0.0
        %370 = vmatpush1.msra.mxu0 0.0
        %371 = vmatprep.subr.mxu0 0.0
        %372 = vmatpush1.msra.mxu0 0.0
        %373 = vmatprep.subr.mxu0 0.0
        %374 = vmatpush1.msra.mxu0 0.0
        %375 = vmatprep.subr.mxu0 0.0
        %376 = vmatpush1.msra.mxu0 0.0
        %377 = vmatprep.subr.mxu0 0.0
        %378 = vmatpush1.msra.mxu0 0.0
        %379 = vmatprep.subr.mxu0 0.0
        %380 = vmatpush1.msra.mxu0 0.0
        %381 = vmatprep.subr.mxu0 0.0
        %382 = vmatpush1.msra.mxu0 0.0
        %383 = vmatprep.subr.mxu0 0.0
        %384 = vmatpush1.msra.mxu0 0.0
        %385 = vmatprep.subr.mxu0 0.0
        %386 = vmatpush1.msra.mxu0 0.0
        %387 = vmatprep.subr.mxu0 0.0
        %388 = vmatpush1.msra.mxu0 0.0
        %389 = vmatprep.subr.mxu0 0.0
        %390 = vmatpush1.msra.mxu0 0.0
        %391 = vmatprep.subr.mxu0 0.0
        %392 = vmatpush1.msra.mxu0 0.0
        %393 = vmatprep.subr.mxu0 0.0
        %394 = vmatpush1.msra.mxu0 0.0
        %395 = vmatprep.subr.mxu0 0.0
        %396 = vmatpush1.msra.mxu0 0.0
        %397 = vmatprep.subr.mxu0 0.0
        %398 = vmatpush1.msra.mxu0 0.0
        %399 = vmatprep.subr.mxu0 0.0
        %400 = vmatpush1.msra.mxu0 0.0
        %401 = vmatprep.subr.mxu0 0.0
        %402 = vmatpush1.msra.mxu0 0.0
        %403 = vmatprep.subr.mxu0 0.0
        %404 = vmatpush1.msra.mxu0 0.0
        %405 = vmatprep.mubr.f32.mxu0 0.0
        %406 = vmatmul.mubr.f32.gmra.mrb[0].mxu0 %v339
        %v407 = vpop.f32.mrb[0].mxu0
        %v408 = vadd.f32 %v335, %v407
        %v409 = vpop.f32.mrb[0].mxu0
        %410 = vdwg.mxu0
        %v411 = vmax.f32 %v408, 0.0
        %v412 = vld [vmem:[#allocation7] sm:$0xff]
        %v413 = vld [vmem:[#allocation7 + $0x8] sm:$0xff]
        %v414 = vld [vmem:[#allocation7 + $0x10] sm:$0xff]
        %v415 = vld [vmem:[#allocation7 + $0x18] sm:$0xff]
        %v416 = vld [vmem:[%s4] sm:$0x1]
        %v418 = vlaneseq
        %v419 = vshrl.u32 %v418, 7
        %v420 = vsub.s32 0, %v419
        %v421 = vrot.slane %v416, %v420
        %vm423 = vcmask 261120
        %v425 = vsel %vm423, %v411, 0
        %427 = vmatprep.subr.mxu0 0.0
        %428 = vmatpush1.msra.mxu0 %v412
        %429 = vmatprep.subr.mxu0 0.0
        %430 = vmatpush1.msra.mxu0 %v413
        %431 = vmatprep.subr.mxu0 0.0
        %432 = vmatpush1.msra.mxu0 %v414
        %433 = vmatprep.subr.mxu0 0.0
        %434 = vmatpush1.msra.mxu0 %v415
        %435 = vmatprep.subr.mxu0 0.0
        %436 = vmatpush1.msra.mxu0 0.0
        %437 = vmatprep.subr.mxu0 0.0
        %438 = vmatpush1.msra.mxu0 0.0
        %439 = vmatprep.subr.mxu0 0.0
        %440 = vmatpush1.msra.mxu0 0.0
        %441 = vmatprep.subr.mxu0 0.0
        %442 = vmatpush1.msra.mxu0 0.0
        %443 = vmatprep.subr.mxu0 0.0
        %444 = vmatpush1.msra.mxu0 0.0
        %445 = vmatprep.subr.mxu0 0.0
        %446 = vmatpush1.msra.mxu0 0.0
        %447 = vmatprep.subr.mxu0 0.0
        %448 = vmatpush1.msra.mxu0 0.0
        %449 = vmatprep.subr.mxu0 0.0
        %450 = vmatpush1.msra.mxu0 0.0
        %451 = vmatprep.subr.mxu0 0.0
        %452 = vmatpush1.msra.mxu0 0.0
        %453 = vmatprep.subr.mxu0 0.0
        %454 = vmatpush1.msra.mxu0 0.0
        %455 = vmatprep.subr.mxu0 0.0
        %456 = vmatpush1.msra.mxu0 0.0
        %457 = vmatprep.subr.mxu0 0.0
        %458 = vmatpush1.msra.mxu0 0.0
        %459 = vmatprep.subr.mxu0 0.0
        %460 = vmatpush1.msra.mxu0 0.0
        %461 = vmatprep.subr.mxu0 0.0
        %462 = vmatpush1.msra.mxu0 0.0
        %463 = vmatprep.subr.mxu0 0.0
        %464 = vmatpush1.msra.mxu0 0.0
        %465 = vmatprep.subr.mxu0 0.0
        %466 = vmatpush1.msra.mxu0 0.0
        %467 = vmatprep.subr.mxu0 0.0
        %468 = vmatpush1.msra.mxu0 0.0
        %469 = vmatprep.subr.mxu0 0.0
        %470 = vmatpush1.msra.mxu0 0.0
        %471 = vmatprep.subr.mxu0 0.0
        %472 = vmatpush1.msra.mxu0 0.0
        %473 = vmatprep.subr.mxu0 0.0
        %474 = vmatpush1.msra.mxu0 0.0
        %475 = vmatprep.subr.mxu0 0.0
        %476 = vmatpush1.msra.mxu0 0.0
        %477 = vmatprep.subr.mxu0 0.0
        %478 = vmatpush1.msra.mxu0 0.0
        %479 = vmatprep.subr.mxu0 0.0
        %480 = vmatpush1.msra.mxu0 0.0
        %481 = vmatprep.subr.mxu0 0.0
        %482 = vmatpush1.msra.mxu0 0.0
        %483 = vmatprep.subr.mxu0 0.0
        %484 = vmatpush1.msra.mxu0 0.0
        %485 = vmatprep.subr.mxu0 0.0
        %486 = vmatpush1.msra.mxu0 0.0
        %487 = vmatprep.subr.mxu0 0.0
        %488 = vmatpush1.msra.mxu0 0.0
        %489 = vmatprep.subr.mxu0 0.0
        %490 = vmatpush1.msra.mxu0 0.0
        %491 = vmatprep.mubr.f32.mxu0 0.0
        %492 = vmatmul.mubr.f32.gmra.mrb[0].mxu0 %v425
        %v493 = vpop.f32.mrb[0].mxu0
        %v494 = vadd.f32 %v421, %v493
        %v495 = vpop.f32.mrb[0].mxu0
        %496 = vdwg.mxu0
        %v497 = vld [vmem:[%s326] sm:$0x1]
        %v499 = vlaneseq
        %v500 = vshrl.u32 %v499, 7
        %v501 = vsub.s32 0, %v500
        %v502 = vrot.slane %v497, %v501
        %v504 = vadd.f32 %v494, %v502
        %vm505 = vcmask 254976
        %506 = vst.msk [vmem:[%s323] sm:$0x3] %vm505, %v504
        %s507 = sand.u32 %s184, 1
        %s508 = scalar_lea.sflag [#allocation4], %s507
        %s509 = sand.u32 %s184, 1
        %s510 = smul.addr %s509, 2
        %s511 = scalar_lea.vmem [#allocation8], %s510
        // Predicated region
        $region57: #{tpu_custom_call.1} parent=43 // pred_check
          %p512 = pneg %p194
        $region58: #{tpu_custom_call.1} parent=43 // pred_check_branch
          %514 = sbr.rel (%p512) target = $region60
        $region59: #{tpu_custom_call.1} parent=43 // pred_region
          %s516 = ssub.s32 32, 32
          %517 = vsyncadd %s508, %s516
          %s518 = sadd.s32 %s29, %s28
          %s519 = smul.addr %s518, 32
          %s520 = scalar_lea.hbm %s6, %s519
          %s522 = sshll.u32 %s511, 4
          %s523 = int_to_ptr.vmem [resolvable:$true] %s522
          %525 = dma.vmem_to_hbm [thread:$0]  %s523, 32, %s520, %s508
        $region60: #{tpu_custom_call.1} parent=43 // pred_fallthru
          _
      $region44: #{tpu_custom_call.1} parent=5 // pred_fallthru
        _
      %p526 = scmp.le.s32.totalorder 2, %s19
      // Predicated region
      $region61: #{tpu_custom_call.1} parent=5 // pred_check
        %p527 = pneg %p526
      $region62: #{tpu_custom_call.1} parent=5 // pred_check_branch
        %529 = sbr.rel (%p527) target = $region64
      $region63: #{tpu_custom_call.1} parent=5 // pred_region
        %s530 = ssub.s32 %s19, 2
        // Predicated region
        $region65: #{tpu_custom_call.1} parent=63 // pred_check
          %p531 = pneg %p200
        $region66: #{tpu_custom_call.1} parent=63 // pred_check_branch
          %533 = sbr.rel (%p531) target = $region68
        $region67: #{tpu_custom_call.1} parent=63 // pred_region
          %s534 = sand.u32 %s185, 1
          %s535 = scalar_lea.sflag [#allocation4], %s534
          %s536 = sand.u32 %s185, 1
          %s537 = smul.addr %s536, 2
          %s538 = scalar_lea.vmem [#allocation8], %s537
          %539 = dma.done %s535, 32
        $region68: #{tpu_custom_call.1} parent=63 // pred_fallthru
          _
      $region64: #{tpu_custom_call.1} parent=5 // pred_fallthru
        _
    $region6: #{tpu_custom_call.1} parent=1 // loop_footer
      %s23 = sadd.s32 1, %s19
    $region7: #{tpu_custom_call.1} parent=1 // loop_footer_branch
      %18 = sbr.rel target = $region3
    $region8: #{tpu_custom_call.1} parent=1 // loop_exit
      _
    %540 = vsyncpa [#allocation3], 1
    %s541 = scalar_lea.sflag [#allocation3], 1
    %542 = vsyncpa %s541, 1
    %543 = vsyncpa [#allocation6], 1
    %544 = vsyncpa [#allocation4], 1
    %s545 = scalar_lea.sflag [#allocation4], 1
    %546 = vsyncpa %s545, 1

</llo_original>
